<compile_context>
chip_gen: v6e
topology: v6e:2x2x1
jax: 0.10.0
libtpu: 0.0.40
codegen_flags: <defaults>
</compile_context>

<pallas_src>
import functools

import jax
import jax.numpy as jnp
from jax.experimental import pallas as pl
from jax.experimental.pallas import tpu as pltpu  # noqa: F401  (TPU backend)

LANE = 128   # only the FINAL output feature dim is padded to this (lane-dense store)


def _round_up(x, m):
    return ((x + m - 1) // m) * m


def _full_spec(shape):
    # whole-array block (block_shape equal to array dims), grid = ()
    return pl.BlockSpec(shape, lambda: (0,) * len(shape))


# ---------------------------------------------------------------------------
# Fused Pallas kernel: entire forward in one call
# ---------------------------------------------------------------------------
def _make_fused_kernel(num_conv, num_dense, matmul_dtype):
    def kernel(*refs):
        a_ref, p_ref, x_ref = refs[0], refs[1], refs[2]
        idx = 3
        conv_wb = []
        for _ in range(num_conv):
            conv_wb.append((refs[idx], refs[idx + 1]))
            idx += 2
        dense_wb = []
        for _ in range(num_dense):
            dense_wb.append((refs[idx], refs[idx + 1]))
            idx += 2
        o_ref = refs[idx]

        # A_hat / P / x / W arrive pre-cast to matmul_dtype -> no input casts.
        a = a_ref[...]            # [n_pad, n_pad]   (loaded once, reused)
        h = x_ref[...]            # [n_pad, f_in_pad]

        # GCNConv stack:  h = relu(A_hat @ (h @ W) + b), f32 MXU accumulation.
        for (w_ref, b_ref) in conv_wb:
            xw = jnp.dot(h, w_ref[...], preferred_element_type=jnp.float32)
            agg = jnp.dot(a, xw.astype(matmul_dtype),
                          preferred_element_type=jnp.float32)
            # bias AFTER aggregation (padded node rows masked by A/P zero cols)
            h = jnp.maximum(agg + b_ref[...], 0.0).astype(matmul_dtype)

        # global_mean_pool:  [g_pad, n_pad] @ [n_pad, F]
        h = jnp.dot(p_ref[...], h, preferred_element_type=jnp.float32)

        # dense head: Linear+ReLU x (num_dense-1), then final Linear
        for (w_ref, b_ref) in dense_wb[:-1]:
            h = jnp.dot(h.astype(matmul_dtype), w_ref[...],
                        preferred_element_type=jnp.float32)
            h = jnp.maximum(h + b_ref[...], 0.0)
        w_ref, b_ref = dense_wb[-1]
        # single lane-dense (g_pad, 128) f32 store
        o_ref[...] = jnp.dot(h.astype(matmul_dtype), w_ref[...],
                             preferred_element_type=jnp.float32) + b_ref[...]

    return kernel


# ---------------------------------------------------------------------------
# One-time parameter padding (minimal padding, only final out dim -> 128)
# ---------------------------------------------------------------------------
def pad_params(params, matmul_dtype=jnp.bfloat16):
    def pad_w(w, rows_pad, cols_pad):
        fi, fo = w.shape
        out = jnp.zeros((rows_pad, cols_pad), jnp.float32).at[:fi, :fo].set(w)
        return out.astype(matmul_dtype)

    def pad_b(b, cols_pad):
        # biases stay f32 (tiny; added to the f32 accumulator)
        return jnp.zeros((1, cols_pad), jnp.float32).at[0, : b.shape[0]].set(b)

    conv = []
    for (w, b) in params["conv"]:
        fi, fo = w.shape
        cols = _round_up(fo, 8)
        conv.append((pad_w(w, _round_up(fi, 8), cols), pad_b(b, cols)))

    dense = []
    n_dense = len(params["dense"])
    for i, (w, b) in enumerate(params["dense"]):
        fi, fo = w.shape
        cols = LANE if i == n_dense - 1 else _round_up(fo, 8)
        dense.append((pad_w(w, _round_up(fi, 8), cols), pad_b(b, cols)))

    return {"conv": conv, "dense": dense}


# ---------------------------------------------------------------------------
# Graph preprocessing, built DIRECTLY at padded shape (runs inside the jit)
# ---------------------------------------------------------------------------
def _build_padded_graph(x, edge_index, batch, n_pad, g_pad, matmul_dtype):
    n, f_in = x.shape
    f_in_pad = _round_up(f_in, 8)

    # A_hat = D^{-1/2} (A + I) D^{-1/2}  (PyG GCNConv default normalization).
    # NOTE: assumes no duplicate edges / pre-existing self-loops (as PyG-like).
    src, dst = edge_index[0], edge_index[1]
    a = jnp.zeros((n_pad, n_pad), jnp.float32).at[src, dst].set(1.0)
    diag = jnp.arange(n)
    a = a.at[diag, diag].add(1.0)
    deg = a.sum(axis=1)
    d_inv_sqrt = jnp.where(deg > 0.0,
                           jax.lax.rsqrt(jnp.maximum(deg, 1e-12)), 0.0)
    a_hat = d_inv_sqrt[:, None] * a * d_inv_sqrt[None, :]   # padded rows/cols = 0

    # global_mean_pool matrix P [g_pad, n_pad]; padded nodes -> batch id -1.
    batch_pad = jnp.full((n_pad,), -1, jnp.int32).at[:n].set(batch.astype(jnp.int32))
    onehot = (batch_pad[None, :] ==
              jnp.arange(g_pad, dtype=jnp.int32)[:, None]).astype(jnp.float32)
    counts = jnp.maximum(onehot.sum(axis=1, keepdims=True), 1.0)
    p = onehot / counts

    x_pad = jnp.zeros((n_pad, f_in_pad), jnp.float32).at[:n, :f_in].set(x)

    return (a_hat.astype(matmul_dtype), p.astype(matmul_dtype),
            x_pad.astype(matmul_dtype))


# ---------------------------------------------------------------------------
# Full forward pass: preprocessing + single fused pallas_call, one jit
# ---------------------------------------------------------------------------
@functools.partial(jax.jit,
                   static_argnames=("num_graphs", "output_dim", "matmul_dtype"))
def graph_conv_network_forward(padded_params, x, edge_index, batch, *,
                               num_graphs, output_dim,
                               matmul_dtype=jnp.bfloat16):
    n, _ = x.shape
    sub = 16 if matmul_dtype == jnp.bfloat16 else 8   # sublane quantum
    n_pad = _round_up(max(n, sub), sub)
    g_pad = _round_up(max(num_graphs, 1), 8)          # f32 output sublane quantum

    a_pad, p_pad, x_pad = _build_padded_graph(x, edge_index, batch,
                                              n_pad, g_pad, matmul_dtype)

    conv_wb = padded_params["conv"]
    dense_wb = padded_params["dense"]

    flat_inputs = [a_pad, p_pad, x_pad]
    for (w, b) in conv_wb + dense_wb:
        flat_inputs += [w, b]

    kernel = _make_fused_kernel(len(conv_wb), len(dense_wb), matmul_dtype)

    out_pad = pl.pallas_call(
        kernel,
        out_shape=jax.ShapeDtypeStruct((g_pad, LANE), jnp.float32),
        in_specs=[_full_spec(arr.shape) for arr in flat_inputs],
        out_specs=_full_spec((g_pad, LANE)),
    )(*flat_inputs)

    return out_pad[:num_graphs, :output_dim]


# ---------------------------------------------------------------------------
# Parameter init (true / unpadded shapes, matching the module)
# ---------------------------------------------------------------------------
def init_params(key, conv_layers_num, dense_layers_num, model_dim, hidden_size,
                input_dim, output_dim):
    params = {"conv": [], "dense": []}
    dims_in = [input_dim] + [model_dim] * (conv_layers_num - 1)
    for i in range(conv_layers_num):
        key, k1, k2 = jax.random.split(key, 3)
        w = 0.1 * jax.random.normal(k1, (dims_in[i], model_dim), jnp.float32)
        b = 0.01 * jax.random.normal(k2, (model_dim,), jnp.float32)
        params["conv"].append((w, b))

    if dense_layers_num == 1:
        shapes = [(model_dim, output_dim)]
    else:
        shapes = ([(model_dim, hidden_size)]
                  + [(hidden_size, hidden_size)] * (dense_layers_num - 2)
                  + [(hidden_size, output_dim)])
    for (fi, fo) in shapes:
        key, k1, k2 = jax.random.split(key, 3)
        w = 0.1 * jax.random.normal(k1, (fi, fo), jnp.float32)
        b = 0.01 * jax.random.normal(k2, (fo,), jnp.float32)
        params["dense"].append((w, b))
    return params


# ---------------------------------------------------------------------------
# Pure-JAX reference (f32, unpadded) for a sanity check
# ---------------------------------------------------------------------------
def reference_forward(params, x, edge_index, batch, num_graphs):
    n = x.shape[0]
    src, dst = edge_index[0], edge_index[1]
    a = jnp.zeros((n, n), jnp.float32).at[src, dst].set(1.0) + jnp.eye(n)
    deg = a.sum(axis=1)
    dis = 1.0 / jnp.sqrt(deg)
    a_hat = dis[:, None] * a * dis[None, :]
    h = x
    for (w, b) in params["conv"]:
        h = jnp.maximum(a_hat @ (h @ w) + b, 0.0)
    onehot = (batch[None, :] == jnp.arange(num_graphs)[:, None]).astype(jnp.float32)
    p = onehot / jnp.maximum(onehot.sum(axis=1, keepdims=True), 1.0)
    h = p @ h
    for (w, b) in params["dense"][:-1]:
        h = jnp.maximum(h @ w + b, 0.0)
    w, b = params["dense"][-1]
    return h @ w + b


# ---------------------------------------------------------------------------
# Main
# ---------------------------------------------------------------------------
if __name__ == "__main__":
    key = jax.random.PRNGKey(0)

    # Model hyperparameters (small, consistent with module __init__)
    conv_layers_num = 2
    dense_layers_num = 2
    model_dim = 32
    hidden_size = 32
    input_dim = 8
    output_dim = 4

    # Graph batch: 2 graphs x 8 nodes = 16 nodes, each graph a bidirectional
    # ring -> edge_index of shape [2, 32].
    num_graphs = 2
    nodes_per_graph = 8
    num_nodes = num_graphs * nodes_per_graph

    srcs, dsts = [], []
    for g in range(num_graphs):
        base = g * nodes_per_graph
        for i in range(nodes_per_graph):
            j = (i + 1) % nodes_per_graph
            srcs += [base + i, base + j]
            dsts += [base + j, base + i]
    edge_index = jnp.array([srcs, dsts], dtype=jnp.int32)          # [2, 32]
    batch = jnp.repeat(jnp.arange(num_graphs, dtype=jnp.int32),
                       nodes_per_graph)                            # [16]

    key, kx = jax.random.split(key)
    x = jax.random.normal(kx, (num_nodes, input_dim), jnp.float32)  # [16, 8]

    params = init_params(key, conv_layers_num, dense_layers_num, model_dim,
                         hidden_size, input_dim, output_dim)

    # bf16 operands (f32 accumulation kept) is the default on v5e/v6e/v7x:
    # halves input DMA bytes and feeds the MXU natively.
    matmul_dtype = jnp.bfloat16
    padded_params = pad_params(params, matmul_dtype=matmul_dtype)

    out = graph_conv_network_forward(padded_params, x, edge_index, batch,
                                     num_graphs=num_graphs,
                                     output_dim=output_dim,
                                     matmul_dtype=matmul_dtype)
    out = jax.block_until_ready(out)

    assert out.shape == (num_graphs, output_dim)
    assert bool(jnp.all(jnp.isfinite(out)))

    # Sanity check vs. the f32 pure-JAX reference (bf16 operands -> loose tol).
    ref = reference_forward(params, x, edge_index, batch, num_graphs)
    assert bool(jnp.allclose(out, ref, atol=2e-2, rtol=1e-1)), (out, ref)

    print("KERNEL_OK")
</pallas_src>

<mosaic_0001>
module attributes {stable_mosaic.version = 11 : i64} {
  func.func private @main(%arg0: i32) attributes {dimension_semantics = [#tpu.dimension_semantics<core_parallel>], iteration_bounds = array<i64: 2>, tpu.core_type = #tpu.core_type<sc_scalar_subcore>, window_params = []} {
    return
  }
}

module attributes {stable_mosaic.version = 11 : i64} {
  func.func private @main(%arg0: i32) attributes {dimension_semantics = [#tpu.dimension_semantics<core_parallel>], iteration_bounds = array<i64: 2>, tpu.core_type = #tpu.core_type<sc_scalar_subcore>, window_params = []} {
    return
  }
}

module attributes {stable_mosaic.version = 11 : i64} {
  func.func @kernel(%arg0: memref<16x16xbf16, #tpu.memory_space<vmem>>, %arg1: memref<8x16xbf16, #tpu.memory_space<vmem>>, %arg2: memref<16x8xbf16, #tpu.memory_space<vmem>>, %arg3: memref<8x32xbf16, #tpu.memory_space<vmem>>, %arg4: memref<1x32xf32, #tpu.memory_space<vmem>>, %arg5: memref<32x32xbf16, #tpu.memory_space<vmem>>, %arg6: memref<1x32xf32, #tpu.memory_space<vmem>>, %arg7: memref<32x32xbf16, #tpu.memory_space<vmem>>, %arg8: memref<1x32xf32, #tpu.memory_space<vmem>>, %arg9: memref<32x128xbf16, #tpu.memory_space<vmem>>, %arg10: memref<1x128xf32, #tpu.memory_space<vmem>>, %arg11: memref<8x128xf32, #tpu.memory_space<vmem>>) attributes {dimension_semantics = [], scalar_prefetch = 0 : i64, scratch_operands = 0 : i64, tpu.core_type = #tpu.core_type<tc>} {
    %c0 = arith.constant 0 : index
    %c0_0 = arith.constant 0 : index
    %0 = vector.load %arg0[%c0, %c0_0] : memref<16x16xbf16, #tpu.memory_space<vmem>>, vector<16x16xbf16>
    %c0_1 = arith.constant 0 : index
    %c0_2 = arith.constant 0 : index
    %1 = vector.load %arg2[%c0_1, %c0_2] : memref<16x8xbf16, #tpu.memory_space<vmem>>, vector<16x8xbf16>
    %c0_3 = arith.constant 0 : index
    %c0_4 = arith.constant 0 : index
    %2 = vector.load %arg3[%c0_3, %c0_4] : memref<8x32xbf16, #tpu.memory_space<vmem>>, vector<8x32xbf16>
    %cst = arith.constant dense<0.000000e+00> : vector<16x32xf32>
    %3 = tpu.matmul %1, %2, %cst {dimension_numbers = #tpu.dot_dimension_numbers<[1], [0], [0], [1], [0, 0, 1, 1], [], []>} : vector<16x8xbf16>, vector<8x32xbf16>, vector<16x32xf32> -> vector<16x32xf32>
    %4 = arith.truncf %3 : vector<16x32xf32> to vector<16x32xbf16>
    %cst_5 = arith.constant dense<0.000000e+00> : vector<16x32xf32>
    %5 = tpu.matmul %0, %4, %cst_5 {dimension_numbers = #tpu.dot_dimension_numbers<[1], [0], [0], [1], [0, 0, 1, 1], [], []>} : vector<16x16xbf16>, vector<16x32xbf16>, vector<16x32xf32> -> vector<16x32xf32>
    %c0_6 = arith.constant 0 : index
    %c0_7 = arith.constant 0 : index
    %6 = vector.load %arg4[%c0_6, %c0_7] : memref<1x32xf32, #tpu.memory_space<vmem>>, vector<1x32xf32>
    %7 = vector.broadcast %6 : vector<1x32xf32> to vector<16x32xf32>
    %8 = arith.addf %5, %7 : vector<16x32xf32>
    %cst_8 = arith.constant 0.000000e+00 : f32
    %9 = vector.broadcast %cst_8 : f32 to vector<16x32xf32>
    %10 = arith.maximumf %8, %9 : vector<16x32xf32>
    %11 = arith.truncf %10 : vector<16x32xf32> to vector<16x32xbf16>
    %c0_9 = arith.constant 0 : index
    %c0_10 = arith.constant 0 : index
    %12 = vector.load %arg5[%c0_9, %c0_10] : memref<32x32xbf16, #tpu.memory_space<vmem>>, vector<32x32xbf16>
    %cst_11 = arith.constant dense<0.000000e+00> : vector<16x32xf32>
    %13 = tpu.matmul %11, %12, %cst_11 {dimension_numbers = #tpu.dot_dimension_numbers<[1], [0], [0], [1], [0, 0, 1, 1], [], []>} : vector<16x32xbf16>, vector<32x32xbf16>, vector<16x32xf32> -> vector<16x32xf32>
    %14 = arith.truncf %13 : vector<16x32xf32> to vector<16x32xbf16>
    %cst_12 = arith.constant dense<0.000000e+00> : vector<16x32xf32>
    %15 = tpu.matmul %0, %14, %cst_12 {dimension_numbers = #tpu.dot_dimension_numbers<[1], [0], [0], [1], [0, 0, 1, 1], [], []>} : vector<16x16xbf16>, vector<16x32xbf16>, vector<16x32xf32> -> vector<16x32xf32>
    %c0_13 = arith.constant 0 : index
    %c0_14 = arith.constant 0 : index
    %16 = vector.load %arg6[%c0_13, %c0_14] : memref<1x32xf32, #tpu.memory_space<vmem>>, vector<1x32xf32>
    %17 = vector.broadcast %16 : vector<1x32xf32> to vector<16x32xf32>
    %18 = arith.addf %15, %17 : vector<16x32xf32>
    %cst_15 = arith.constant 0.000000e+00 : f32
    %19 = vector.broadcast %cst_15 : f32 to vector<16x32xf32>
    %20 = arith.maximumf %18, %19 : vector<16x32xf32>
    %21 = arith.truncf %20 : vector<16x32xf32> to vector<16x32xbf16>
    %c0_16 = arith.constant 0 : index
    %c0_17 = arith.constant 0 : index
    %22 = vector.load %arg1[%c0_16, %c0_17] : memref<8x16xbf16, #tpu.memory_space<vmem>>, vector<8x16xbf16>
    %cst_18 = arith.constant dense<0.000000e+00> : vector<8x32xf32>
    %23 = tpu.matmul %22, %21, %cst_18 {dimension_numbers = #tpu.dot_dimension_numbers<[1], [0], [0], [1], [0, 0, 1, 1], [], []>} : vector<8x16xbf16>, vector<16x32xbf16>, vector<8x32xf32> -> vector<8x32xf32>
    %24 = arith.truncf %23 : vector<8x32xf32> to vector<8x32xbf16>
    %c0_19 = arith.constant 0 : index
    %c0_20 = arith.constant 0 : index
    %25 = vector.load %arg7[%c0_19, %c0_20] : memref<32x32xbf16, #tpu.memory_space<vmem>>, vector<32x32xbf16>
    %cst_21 = arith.constant dense<0.000000e+00> : vector<8x32xf32>
    %26 = tpu.matmul %24, %25, %cst_21 {dimension_numbers = #tpu.dot_dimension_numbers<[1], [0], [0], [1], [0, 0, 1, 1], [], []>} : vector<8x32xbf16>, vector<32x32xbf16>, vector<8x32xf32> -> vector<8x32xf32>
    %c0_22 = arith.constant 0 : index
    %c0_23 = arith.constant 0 : index
    %27 = vector.load %arg8[%c0_22, %c0_23] : memref<1x32xf32, #tpu.memory_space<vmem>>, vector<1x32xf32>
    %28 = vector.broadcast %27 : vector<1x32xf32> to vector<8x32xf32>
    %29 = arith.addf %26, %28 : vector<8x32xf32>
    %cst_24 = arith.constant 0.000000e+00 : f32
    %30 = vector.broadcast %cst_24 : f32 to vector<8x32xf32>
    %31 = arith.maximumf %29, %30 : vector<8x32xf32>
    %32 = arith.truncf %31 : vector<8x32xf32> to vector<8x32xbf16>
    %c0_25 = arith.constant 0 : index
    %c0_26 = arith.constant 0 : index
    %33 = vector.load %arg9[%c0_25, %c0_26] : memref<32x128xbf16, #tpu.memory_space<vmem>>, vector<32x128xbf16>
    %cst_27 = arith.constant dense<0.000000e+00> : vector<8x128xf32>
    %34 = tpu.matmul %32, %33, %cst_27 {dimension_numbers = #tpu.dot_dimension_numbers<[1], [0], [0], [1], [0, 0, 1, 1], [], []>} : vector<8x32xbf16>, vector<32x128xbf16>, vector<8x128xf32> -> vector<8x128xf32>
    %c0_28 = arith.constant 0 : index
    %c0_29 = arith.constant 0 : index
    %35 = vector.load %arg10[%c0_28, %c0_29] : memref<1x128xf32, #tpu.memory_space<vmem>>, vector<1x128xf32>
    %36 = vector.broadcast %35 : vector<1x128xf32> to vector<8x128xf32>
    %37 = arith.addf %34, %36 : vector<8x128xf32>
    %c0_30 = arith.constant 0 : index
    %c0_31 = arith.constant 0 : index
    %38 = vector.load %arg11[%c0_30, %c0_31] : memref<8x128xf32, #tpu.memory_space<vmem>>, vector<8x128xf32>
    tpu.vector_store %arg11[%c0_30, %c0_31], %37 {strides = array<i32>} : memref<8x128xf32, #tpu.memory_space<vmem>>, vector<8x128xf32>,
    return
  }
}

</mosaic_0001>

<llo_original>
// kernel: graph_conv_network_forward.1
$region0: #{graph_conv_network_forward.1}
  #allocation0 [shape = 'u32[]', space=smem, size = 0x4, offset = 0x4, fixed_abs, tag = 'smem constant byte address 0x4 - core index']
  #allocation1 [shape = 'u32[144,128]{1,0:T(1,128)}', space=vmem, size = 0x12000, scoped, tag = 'internal scratch']
  %s0 = inlined_call_operand.vmem [shape: bf16[16,16], index: 0, kind: input, shape index: {}]
  %s1 = inlined_call_operand.vmem [shape: bf16[8,16], index: 1, kind: input, shape index: {}]
  %s2 = inlined_call_operand.vmem [shape: bf16[16,8], index: 2, kind: input, shape index: {}]
  %s3 = inlined_call_operand.vmem [shape: bf16[8,32], index: 3, kind: input, shape index: {}]
  %s4 = inlined_call_operand.vmem [shape: f32[1,32], index: 4, kind: input, shape index: {}]
  %s5 = inlined_call_operand.vmem [shape: bf16[32,32], index: 5, kind: input, shape index: {}]
  %s6 = inlined_call_operand.vmem [shape: f32[1,32], index: 6, kind: input, shape index: {}]
  %s7 = inlined_call_operand.vmem [shape: bf16[32,32], index: 7, kind: input, shape index: {}]
  %s8 = inlined_call_operand.vmem [shape: f32[1,32], index: 8, kind: input, shape index: {}]
  %s9 = inlined_call_operand.vmem [shape: bf16[32,128], index: 9, kind: input, shape index: {}]
  %s10 = inlined_call_operand.vmem [shape: f32[1,128], index: 10, kind: input, shape index: {}]
  %s11 = inlined_call_operand.vmem [shape: f32[8,128], index: 11, kind: output, shape index: {}]
  %s12 = sld [smem:[#allocation0]]
  $region54: #{graph_conv_network_forward.1} parent=0
    _
  %s14 = ssub.s32 1, %s12
  %s15 = scalar_select 0, %s14, %s12
  // Predicated region
  $region2: #{graph_conv_network_forward.1} parent=0 // pred_check
    _
  $region3: #{graph_conv_network_forward.1} parent=0 // pred_check_branch
    %17 = sbr.rel (0) target = $region5
  $region4: #{graph_conv_network_forward.1} parent=0 // pred_region
    _
  $region5: #{graph_conv_network_forward.1} parent=0 // pred_fallthru
    _
  // Predicated region
  $region6: #{graph_conv_network_forward.1} parent=0 // pred_check
    _
  $region7: #{graph_conv_network_forward.1} parent=0 // pred_check_branch
    %19 = sbr.rel (0) target = $region9
  $region8: #{graph_conv_network_forward.1} parent=0 // pred_region
    _
  $region9: #{graph_conv_network_forward.1} parent=0 // pred_fallthru
    _
  // Predicated region
  $region10: #{graph_conv_network_forward.1} parent=0 // pred_check
    _
  $region11: #{graph_conv_network_forward.1} parent=0 // pred_check_branch
    %21 = sbr.rel (0) target = $region13
  $region12: #{graph_conv_network_forward.1} parent=0 // pred_region
    _
  $region13: #{graph_conv_network_forward.1} parent=0 // pred_fallthru
    _
  // Predicated region
  $region14: #{graph_conv_network_forward.1} parent=0 // pred_check
    _
  $region15: #{graph_conv_network_forward.1} parent=0 // pred_check_branch
    %23 = sbr.rel (0) target = $region17
  $region16: #{graph_conv_network_forward.1} parent=0 // pred_region
    _
  $region17: #{graph_conv_network_forward.1} parent=0 // pred_fallthru
    _
  // Predicated region
  $region18: #{graph_conv_network_forward.1} parent=0 // pred_check
    _
  $region19: #{graph_conv_network_forward.1} parent=0 // pred_check_branch
    %25 = sbr.rel (0) target = $region21
  $region20: #{graph_conv_network_forward.1} parent=0 // pred_region
    _
  $region21: #{graph_conv_network_forward.1} parent=0 // pred_fallthru
    _
  // Predicated region
  $region22: #{graph_conv_network_forward.1} parent=0 // pred_check
    _
  $region23: #{graph_conv_network_forward.1} parent=0 // pred_check_branch
    %27 = sbr.rel (0) target = $region25
  $region24: #{graph_conv_network_forward.1} parent=0 // pred_region
    _
  $region25: #{graph_conv_network_forward.1} parent=0 // pred_fallthru
    _
  // Predicated region
  $region26: #{graph_conv_network_forward.1} parent=0 // pred_check
    _
  $region27: #{graph_conv_network_forward.1} parent=0 // pred_check_branch
    %29 = sbr.rel (0) target = $region29
  $region28: #{graph_conv_network_forward.1} parent=0 // pred_region
    _
  $region29: #{graph_conv_network_forward.1} parent=0 // pred_fallthru
    _
  // Predicated region
  $region30: #{graph_conv_network_forward.1} parent=0 // pred_check
    _
  $region31: #{graph_conv_network_forward.1} parent=0 // pred_check_branch
    %31 = sbr.rel (0) target = $region33
  $region32: #{graph_conv_network_forward.1} parent=0 // pred_region
    _
  $region33: #{graph_conv_network_forward.1} parent=0 // pred_fallthru
    _
  // Predicated region
  $region34: #{graph_conv_network_forward.1} parent=0 // pred_check
    _
  $region35: #{graph_conv_network_forward.1} parent=0 // pred_check_branch
    %33 = sbr.rel (0) target = $region37
  $region36: #{graph_conv_network_forward.1} parent=0 // pred_region
    _
  $region37: #{graph_conv_network_forward.1} parent=0 // pred_fallthru
    _
  // Predicated region
  $region38: #{graph_conv_network_forward.1} parent=0 // pred_check
    _
  $region39: #{graph_conv_network_forward.1} parent=0 // pred_check_branch
    %35 = sbr.rel (0) target = $region41
  $region40: #{graph_conv_network_forward.1} parent=0 // pred_region
    _
  $region41: #{graph_conv_network_forward.1} parent=0 // pred_fallthru
    _
  // Predicated region
  $region42: #{graph_conv_network_forward.1} parent=0 // pred_check
    _
  $region43: #{graph_conv_network_forward.1} parent=0 // pred_check_branch
    %37 = sbr.rel (0) target = $region45
  $region44: #{graph_conv_network_forward.1} parent=0 // pred_region
    _
  $region45: #{graph_conv_network_forward.1} parent=0 // pred_fallthru
    _
  %v39 = vld [vmem:[%s0] sm:$0xf]
  %v40 = vld [vmem:[%s0 + $0x4] sm:$0xf]
  %v41 = vld [vmem:[%s2] sm:$0xf]
  %v42 = vld [vmem:[%s2 + $0x4] sm:$0xf]
  %v43 = vld [vmem:[%s3] sm:$0xf]
  %v46 = vunpack.c.l.b16 %v41
  %v47 = vunpack.c.l.b16 %v42
  %v48 = vpack.c.b16 %v47, %v46
  %vm49 = vcmask 64512
  %v51 = vsel %vm49, %v48, 0
  %vm53 = vcmask 1043456
  %v55 = vsel %vm53, %v43, 0
  %57 = vmatprep.subr.bf16.mxu0 0
  %58 = vmatpush1.bf16.msra.mxu0 0
  %59 = vmatprep.subr.bf16.mxu0 0
  %60 = vmatpush1.bf16.msra.mxu0 0
  %61 = vmatprep.subr.bf16.mxu0 0
  %62 = vmatpush1.bf16.msra.mxu0 0
  %63 = vmatprep.subr.bf16.mxu0 0
  %64 = vmatpush1.bf16.msra.mxu0 0
  %65 = vmatprep.subr.bf16.mxu0 0
  %66 = vmatpush1.bf16.msra.mxu0 0
  %67 = vmatprep.subr.bf16.mxu0 0
  %68 = vmatpush1.bf16.msra.mxu0 0
  %69 = vmatprep.subr.bf16.mxu0 0
  %70 = vmatpush1.bf16.msra.mxu0 0
  %71 = vmatprep.subr.bf16.mxu0 0
  %72 = vmatpush1.bf16.msra.mxu0 %v55
  %73 = vmatprep.subr.bf16.mxu0 0
  %74 = vmatpush2.bf16.msra.mxu0 0
  %75 = vmatprep.subr.bf16.mxu0 0
  %76 = vmatpush2.bf16.msra.mxu0 0
  %77 = vmatprep.subr.bf16.mxu0 0
  %78 = vmatpush2.bf16.msra.mxu0 0
  %79 = vmatprep.subr.bf16.mxu0 0
  %80 = vmatpush2.bf16.msra.mxu0 0
  %81 = vmatprep.subr.bf16.mxu0 0
  %82 = vmatpush2.bf16.msra.mxu0 0
  %83 = vmatprep.subr.bf16.mxu0 0
  %84 = vmatpush2.bf16.msra.mxu0 0
  %85 = vmatprep.subr.bf16.mxu0 0
  %86 = vmatpush2.bf16.msra.mxu0 0
  %87 = vmatprep.subr.bf16.mxu0 0
  %88 = vmatpush2.bf16.msra.mxu0 0
  %89 = vmatprep.mubr.bf16.mxu0 0
  %90 = vmatmul.mubr.bf16.gmra.mxu0 %v51
  %v91 = vpop.f32.mrf.mxu0
  %v92 = vadd.f32 0.0, %v91
  %v93 = vpop.f32.mrf.mxu0
  %v94 = vpop.f32.mrf.mxu0
  %v95 = vadd.f32 0.0, %v94
  %v96 = vpop.f32.mrf.mxu0
  %97 = vdwg.mxu0
  %v98 = vpack.c.bf16 %v95, %v92
  %v99 = vld [vmem:[%s4] sm:$0x1]
  %v101 = vlaneseq
  %v102 = vshrl.u32 %v101, 7
  %v103 = vsub.s32 0, %v102
  %v104 = vrot.slane %v99, %v103
  %v108 = vunpack.c.l.b16 %v39
  %v109 = vunpack.c.l.b16 %v40
  %v110 = vpack.c.b16 %v109, %v108
  %vm111 = vcmask 130048
  %v113 = vsel %vm111, %v110, 0
  %115 = vmatprep.subr.bf16.mxu0 0
  %116 = vmatpush1.bf16.msra.mxu0 0
  %117 = vmatprep.subr.bf16.mxu0 0
  %118 = vmatpush1.bf16.msra.mxu0 0
  %119 = vmatprep.subr.bf16.mxu0 0
  %120 = vmatpush1.bf16.msra.mxu0 0
  %121 = vmatprep.subr.bf16.mxu0 0
  %122 = vmatpush1.bf16.msra.mxu0 0
  %123 = vmatprep.subr.bf16.mxu0 0
  %124 = vmatpush1.bf16.msra.mxu0 0
  %125 = vmatprep.subr.bf16.mxu0 0
  %126 = vmatpush1.bf16.msra.mxu0 0
  %127 = vmatprep.subr.bf16.mxu0 0
  %128 = vmatpush1.bf16.msra.mxu0 0
  %129 = vmatprep.subr.bf16.mxu0 0
  %130 = vmatpush1.bf16.msra.mxu0 %v98
  %131 = vmatprep.subr.bf16.mxu0 0
  %132 = vmatpush2.bf16.msra.mxu0 0
  %133 = vmatprep.subr.bf16.mxu0 0
  %134 = vmatpush2.bf16.msra.mxu0 0
  %135 = vmatprep.subr.bf16.mxu0 0
  %136 = vmatpush2.bf16.msra.mxu0 0
  %137 = vmatprep.subr.bf16.mxu0 0
  %138 = vmatpush2.bf16.msra.mxu0 0
  %139 = vmatprep.subr.bf16.mxu0 0
  %140 = vmatpush2.bf16.msra.mxu0 0
  %141 = vmatprep.subr.bf16.mxu0 0
  %142 = vmatpush2.bf16.msra.mxu0 0
  %143 = vmatprep.subr.bf16.mxu0 0
  %144 = vmatpush2.bf16.msra.mxu0 0
  %145 = vmatprep.subr.bf16.mxu0 0
  %146 = vmatpush2.bf16.msra.mxu0 0
  %147 = vmatprep.mubr.bf16.mxu0 0
  %148 = vmatmul.mubr.bf16.gmra.mxu0 %v113
  %v149 = vpop.f32.mrf.mxu0
  %v150 = vadd.f32 %v104, %v149
  %v151 = vpop.f32.mrf.mxu0
  %v152 = vpop.f32.mrf.mxu0
  %v153 = vadd.f32 %v104, %v152
  %v154 = vpop.f32.mrf.mxu0
  %155 = vdwg.mxu0
  %v156 = vmax.f32 %v150, 0.0
  %v157 = vmax.f32 %v153, 0.0
  %v158 = vpack.c.bf16 %v157, %v156
  %v159 = vld [vmem:[%s5] sm:$0xf]
  %v160 = vld [vmem:[%s5 + $0x4] sm:$0xf]
  %v161 = vld [vmem:[%s5 + $0x8] sm:$0xf]
  %v162 = vld [vmem:[%s5 + $0xc] sm:$0xf]
  %v167 = vunpack.c.l.b16 %v159
  %v168 = vunpack.c.l.b16 %v160
  %v169 = vunpack.c.l.b16 %v161
  %v170 = vunpack.c.l.b16 %v162
  %v171 = vpack.c.b16 %v168, %v167
  %v172 = vpack.c.b16 %v170, %v169
  %vm175 = vcmask 261120
  %v177 = vsel %vm175, %v158, 0
  %179 = vmatprep.subr.bf16.mxu0 0
  %180 = vmatpush1.bf16.msra.mxu0 0
  %181 = vmatprep.subr.bf16.mxu0 0
  %182 = vmatpush1.bf16.msra.mxu0 0
  %183 = vmatprep.subr.bf16.mxu0 0
  %184 = vmatpush1.bf16.msra.mxu0 0
  %185 = vmatprep.subr.bf16.mxu0 0
  %186 = vmatpush1.bf16.msra.mxu0 0
  %187 = vmatprep.subr.bf16.mxu0 0
  %188 = vmatpush1.bf16.msra.mxu0 0
  %189 = vmatprep.subr.bf16.mxu0 0
  %190 = vmatpush1.bf16.msra.mxu0 0
  %191 = vmatprep.subr.bf16.mxu0 0
  %192 = vmatpush1.bf16.msra.mxu0 %v172
  %193 = vmatprep.subr.bf16.mxu0 0
  %194 = vmatpush1.bf16.msra.mxu0 %v171
  %195 = vmatprep.subr.bf16.mxu0 0
  %196 = vmatpush2.bf16.msra.mxu0 0
  %197 = vmatprep.subr.bf16.mxu0 0
  %198 = vmatpush2.bf16.msra.mxu0 0
  %199 = vmatprep.subr.bf16.mxu0 0
  %200 = vmatpush2.bf16.msra.mxu0 0
  %201 = vmatprep.subr.bf16.mxu0 0
  %202 = vmatpush2.bf16.msra.mxu0 0
  %203 = vmatprep.subr.bf16.mxu0 0
  %204 = vmatpush2.bf16.msra.mxu0 0
  %205 = vmatprep.subr.bf16.mxu0 0
  %206 = vmatpush2.bf16.msra.mxu0 0
  %207 = vmatprep.subr.bf16.mxu0 0
  %208 = vmatpush2.bf16.msra.mxu0 0
  %209 = vmatprep.subr.bf16.mxu0 0
  %210 = vmatpush2.bf16.msra.mxu0 0
  %211 = vmatprep.mubr.bf16.mxu0 0
  %212 = vmatmul.mubr.bf16.gmra.mxu0 %v177
  %v213 = vpop.f32.mrf.mxu0
  %v214 = vadd.f32 0.0, %v213
  %v215 = vpop.f32.mrf.mxu0
  %v216 = vpop.f32.mrf.mxu0
  %v217 = vadd.f32 0.0, %v216
  %v218 = vpop.f32.mrf.mxu0
  %219 = vdwg.mxu0
  %v220 = vpack.c.bf16 %v217, %v214
  %v221 = vld [vmem:[%s6] sm:$0x1]
  %v223 = vlaneseq
  %v224 = vshrl.u32 %v223, 7
  %v225 = vsub.s32 0, %v224
  %v226 = vrot.slane %v221, %v225
  %228 = vmatprep.subr.bf16.mxu0 0
  %229 = vmatpush1.bf16.msra.mxu0 0
  %230 = vmatprep.subr.bf16.mxu0 0
  %231 = vmatpush1.bf16.msra.mxu0 0
  %232 = vmatprep.subr.bf16.mxu0 0
  %233 = vmatpush1.bf16.msra.mxu0 0
  %234 = vmatprep.subr.bf16.mxu0 0
  %235 = vmatpush1.bf16.msra.mxu0 0
  %236 = vmatprep.subr.bf16.mxu0 0
  %237 = vmatpush1.bf16.msra.mxu0 0
  %238 = vmatprep.subr.bf16.mxu0 0
  %239 = vmatpush1.bf16.msra.mxu0 0
  %240 = vmatprep.subr.bf16.mxu0 0
  %241 = vmatpush1.bf16.msra.mxu0 0
  %242 = vmatprep.subr.bf16.mxu0 0
  %243 = vmatpush1.bf16.msra.mxu0 %v220
  %244 = vmatprep.subr.bf16.mxu0 0
  %245 = vmatpush2.bf16.msra.mxu0 0
  %246 = vmatprep.subr.bf16.mxu0 0
  %247 = vmatpush2.bf16.msra.mxu0 0
  %248 = vmatprep.subr.bf16.mxu0 0
  %249 = vmatpush2.bf16.msra.mxu0 0
  %250 = vmatprep.subr.bf16.mxu0 0
  %251 = vmatpush2.bf16.msra.mxu0 0
  %252 = vmatprep.subr.bf16.mxu0 0
  %253 = vmatpush2.bf16.msra.mxu0 0
  %254 = vmatprep.subr.bf16.mxu0 0
  %255 = vmatpush2.bf16.msra.mxu0 0
  %256 = vmatprep.subr.bf16.mxu0 0
  %257 = vmatpush2.bf16.msra.mxu0 0
  %258 = vmatprep.subr.bf16.mxu0 0
  %259 = vmatpush2.bf16.msra.mxu0 0
  %260 = vmatprep.mubr.bf16.mxu0 0
  %261 = vmatmul.mubr.bf16.gmra.mxu0 %v113
  %v262 = vpop.f32.mrf.mxu0
  %v263 = vadd.f32 %v226, %v262
  %v264 = vpop.f32.mrf.mxu0
  %v265 = vpop.f32.mrf.mxu0
  %v266 = vadd.f32 %v226, %v265
  %v267 = vpop.f32.mrf.mxu0
  %268 = vdwg.mxu0
  %v269 = vmax.f32 %v263, 0.0
  %v270 = vmax.f32 %v266, 0.0
  %v271 = vpack.c.bf16 %v270, %v269
  %v272 = vld [vmem:[%s1] sm:$0xf]
  %v274 = vsel %vm111, %v272, 0
  %276 = vmatprep.subr.bf16.mxu0 0
  %277 = vmatpush1.bf16.msra.mxu0 0
  %278 = vmatprep.subr.bf16.mxu0 0
  %279 = vmatpush1.bf16.msra.mxu0 0
  %280 = vmatprep.subr.bf16.mxu0 0
  %281 = vmatpush1.bf16.msra.mxu0 0
  %282 = vmatprep.subr.bf16.mxu0 0
  %283 = vmatpush1.bf16.msra.mxu0 0
  %284 = vmatprep.subr.bf16.mxu0 0
  %285 = vmatpush1.bf16.msra.mxu0 0
  %286 = vmatprep.subr.bf16.mxu0 0
  %287 = vmatpush1.bf16.msra.mxu0 0
  %288 = vmatprep.subr.bf16.mxu0 0
  %289 = vmatpush1.bf16.msra.mxu0 0
  %290 = vmatprep.subr.bf16.mxu0 0
  %291 = vmatpush1.bf16.msra.mxu0 %v271
  %292 = vmatprep.subr.bf16.mxu0 0
  %293 = vmatpush2.bf16.msra.mxu0 0
  %294 = vmatprep.subr.bf16.mxu0 0
  %295 = vmatpush2.bf16.msra.mxu0 0
  %296 = vmatprep.subr.bf16.mxu0 0
  %297 = vmatpush2.bf16.msra.mxu0 0
  %298 = vmatprep.subr.bf16.mxu0 0
  %299 = vmatpush2.bf16.msra.mxu0 0
  %300 = vmatprep.subr.bf16.mxu0 0
  %301 = vmatpush2.bf16.msra.mxu0 0
  %302 = vmatprep.subr.bf16.mxu0 0
  %303 = vmatpush2.bf16.msra.mxu0 0
  %304 = vmatprep.subr.bf16.mxu0 0
  %305 = vmatpush2.bf16.msra.mxu0 0
  %306 = vmatprep.subr.bf16.mxu0 0
  %307 = vmatpush2.bf16.msra.mxu0 0
  %308 = vmatprep.mubr.bf16.mxu0 0
  %309 = vmatmul.mubr.bf16.gmra.mxu0 %v274
  %v310 = vpop.f32.mrf.mxu0
  %v311 = vadd.f32 0.0, %v310
  %v312 = vpop.f32.mrf.mxu0
  %v313 = vpop.f32.mrf.mxu0
  %v314 = vpop.f32.mrf.mxu0
  %315 = vdwg.mxu0
  %v316 = vpack.c.bf16 %v311, %v311
  %v317 = vld [vmem:[%s7] sm:$0xf]
  %v318 = vld [vmem:[%s7 + $0x4] sm:$0xf]
  %v319 = vld [vmem:[%s7 + $0x8] sm:$0xf]
  %v320 = vld [vmem:[%s7 + $0xc] sm:$0xf]
  %v321 = vld [vmem:[%s8] sm:$0x1]
  %v323 = vlaneseq
  %v324 = vshrl.u32 %v323, 7
  %v325 = vsub.s32 0, %v324
  %v326 = vrot.slane %v321, %v325
  %v332 = vunpack.c.l.b16 %v317
  %v333 = vunpack.c.l.b16 %v318
  %v334 = vunpack.c.l.b16 %v319
  %v335 = vunpack.c.l.b16 %v320
  %v336 = vpack.c.b16 %v333, %v332
  %v337 = vpack.c.b16 %v335, %v334
  %v341 = vsel %vm175, %v316, 0
  %343 = vmatprep.subr.bf16.mxu0 0
  %344 = vmatpush1.bf16.msra.mxu0 0
  %345 = vmatprep.subr.bf16.mxu0 0
  %346 = vmatpush1.bf16.msra.mxu0 0
  %347 = vmatprep.subr.bf16.mxu0 0
  %348 = vmatpush1.bf16.msra.mxu0 0
  %349 = vmatprep.subr.bf16.mxu0 0
  %350 = vmatpush1.bf16.msra.mxu0 0
  %351 = vmatprep.subr.bf16.mxu0 0
  %352 = vmatpush1.bf16.msra.mxu0 0
  %353 = vmatprep.subr.bf16.mxu0 0
  %354 = vmatpush1.bf16.msra.mxu0 0
  %355 = vmatprep.subr.bf16.mxu0 0
  %356 = vmatpush1.bf16.msra.mxu0 %v337
  %357 = vmatprep.subr.bf16.mxu0 0
  %358 = vmatpush1.bf16.msra.mxu0 %v336
  %359 = vmatprep.subr.bf16.mxu0 0
  %360 = vmatpush2.bf16.msra.mxu0 0
  %361 = vmatprep.subr.bf16.mxu0 0
  %362 = vmatpush2.bf16.msra.mxu0 0
  %363 = vmatprep.subr.bf16.mxu0 0
  %364 = vmatpush2.bf16.msra.mxu0 0
  %365 = vmatprep.subr.bf16.mxu0 0
  %366 = vmatpush2.bf16.msra.mxu0 0
  %367 = vmatprep.subr.bf16.mxu0 0
  %368 = vmatpush2.bf16.msra.mxu0 0
  %369 = vmatprep.subr.bf16.mxu0 0
  %370 = vmatpush2.bf16.msra.mxu0 0
  %371 = vmatprep.subr.bf16.mxu0 0
  %372 = vmatpush2.bf16.msra.mxu0 0
  %373 = vmatprep.subr.bf16.mxu0 0
  %374 = vmatpush2.bf16.msra.mxu0 0
  %375 = vmatprep.mubr.bf16.mxu0 0
  %376 = vmatmul.mubr.bf16.gmra.mxu0 %v341
  %v377 = vpop.f32.mrf.mxu0
  %v378 = vadd.f32 %v326, %v377
  %v379 = vpop.f32.mrf.mxu0
  %v380 = vpop.f32.mrf.mxu0
  %v381 = vpop.f32.mrf.mxu0
  %382 = vdwg.mxu0
  %v383 = vmax.f32 %v378, 0.0
  %v384 = vpack.c.bf16 %v383, %v383
  %v385 = vld [vmem:[%s9] sm:$0xf]
  %v386 = vld [vmem:[%s9 + $0x4] sm:$0xf]
  %v387 = vld [vmem:[%s9 + $0x8] sm:$0xf]
  %v388 = vld [vmem:[%s9 + $0xc] sm:$0xf]
  %v389 = vld [vmem:[%s10] sm:$0x1]
  %v391 = vlaneseq
  %v392 = vshrl.u32 %v391, 7
  %v393 = vsub.s32 0, %v392
  %v394 = vrot.slane %v389, %v393
  %v400 = vunpack.c.l.b16 %v385
  %v401 = vunpack.c.l.b16 %v386
  %v402 = vunpack.c.l.b16 %v387
  %v403 = vunpack.c.l.b16 %v388
  %v404 = vpack.c.b16 %v401, %v400
  %v405 = vpack.c.b16 %v403, %v402
  %v409 = vsel %vm175, %v384, 0
  %411 = vmatprep.subr.bf16.mxu0 0
  %412 = vmatpush1.bf16.msra.mxu0 0
  %413 = vmatprep.subr.bf16.mxu0 0
  %414 = vmatpush1.bf16.msra.mxu0 0
  %415 = vmatprep.subr.bf16.mxu0 0
  %416 = vmatpush1.bf16.msra.mxu0 0
  %417 = vmatprep.subr.bf16.mxu0 0
  %418 = vmatpush1.bf16.msra.mxu0 0
  %419 = vmatprep.subr.bf16.mxu0 0
  %420 = vmatpush1.bf16.msra.mxu0 0
  %421 = vmatprep.subr.bf16.mxu0 0
  %422 = vmatpush1.bf16.msra.mxu0 0
  %423 = vmatprep.subr.bf16.mxu0 0
  %424 = vmatpush1.bf16.msra.mxu0 %v405
  %425 = vmatprep.subr.bf16.mxu0 0
  %426 = vmatpush1.bf16.msra.mxu0 %v404
  %427 = vmatprep.subr.bf16.mxu0 0
  %428 = vmatpush2.bf16.msra.mxu0 0
  %429 = vmatprep.subr.bf16.mxu0 0
  %430 = vmatpush2.bf16.msra.mxu0 0
  %431 = vmatprep.subr.bf16.mxu0 0
  %432 = vmatpush2.bf16.msra.mxu0 0
  %433 = vmatprep.subr.bf16.mxu0 0
  %434 = vmatpush2.bf16.msra.mxu0 0
  %435 = vmatprep.subr.bf16.mxu0 0
  %436 = vmatpush2.bf16.msra.mxu0 0
  %437 = vmatprep.subr.bf16.mxu0 0
  %438 = vmatpush2.bf16.msra.mxu0 0
  %439 = vmatprep.subr.bf16.mxu0 0
  %440 = vmatpush2.bf16.msra.mxu0 0
  %441 = vmatprep.subr.bf16.mxu0 0
  %442 = vmatpush2.bf16.msra.mxu0 0
  %443 = vmatprep.mubr.bf16.mxu0 0
  %444 = vmatmul.mubr.bf16.gmra.mxu0 %v409
  %v445 = vpop.f32.mrf.mxu0
  %v446 = vadd.f32 %v394, %v445
  %v447 = vpop.f32.mrf.mxu0
  %v448 = vpop.f32.mrf.mxu0
  %v449 = vpop.f32.mrf.mxu0
  %450 = vdwg.mxu0
  %451 = vst [vmem:[%s11] sm:$0xff] %v446
  // Predicated region
  $region46: #{graph_conv_network_forward.1} parent=0 // pred_check
    _
  $region47: #{graph_conv_network_forward.1} parent=0 // pred_check_branch
    %453 = sbr.rel (0) target = $region49
  $region48: #{graph_conv_network_forward.1} parent=0 // pred_region
    _
  $region49: #{graph_conv_network_forward.1} parent=0 // pred_fallthru
    _
  // Predicated region
  $region50: #{graph_conv_network_forward.1} parent=0 // pred_check
    _
  $region51: #{graph_conv_network_forward.1} parent=0 // pred_check_branch
    %455 = sbr.rel (0) target = $region53
  $region52: #{graph_conv_network_forward.1} parent=0 // pred_region
    _
  $region53: #{graph_conv_network_forward.1} parent=0 // pred_fallthru
    _

</llo_original>
